<compile_context>
chip_gen: v7x
topology: tpu7x:2x2x1
jax: 0.10.0
libtpu: 0.0.40
codegen_flags: <defaults>
</compile_context>

<pallas_src>
import jax
import jax.numpy as jnp
from jax.experimental import pallas as pl
from jax.experimental.pallas import tpu as pltpu


def _do_nothing_loss_kernel(zero_ref, out_ref):
    # Copy the (1, 1) registered zero buffer into the (1, 1) output tile.
    out_ref[...] = zero_ref[...]


class DoNothingLoss:
    """JAX/Pallas port of _DoNothingLoss."""

    def __init__(self):
        # Mirrors register_buffer('zero', torch.tensor([0.0]).float()),
        # stored as a 2-D (1, 1) tile so it is a valid VMEM block.
        self.zero = jnp.zeros((1, 1), dtype=jnp.float32)
        # Build the pallas_call once (no grid: single invocation, full-array
        # blocks for both the (1,1) input and (1,1) output).
        self._call = pl.pallas_call(
            _do_nothing_loss_kernel,
            out_shape=jax.ShapeDtypeStruct((1, 1), jnp.float32),
            in_specs=[pl.BlockSpec((1, 1), lambda: (0, 0))],
            out_specs=pl.BlockSpec((1, 1), lambda: (0, 0)),
            compiler_params=pltpu.CompilerParams(vmem_limit_bytes=1 << 20),
        )

    def __call__(self, scores: jax.Array, labels: jax.Array) -> jax.Array:
        assert scores.shape[1] > 1, "Number of classes must be > 1 ....[NOT OK]"
        # scores / labels are intentionally NOT passed into the kernel: the
        # module ignores them, so DMA-ing them would only waste HBM bandwidth
        # (on every TPU generation the optimal byte count here is zero).
        out = self._call(self.zero)
        return out[0]  # shape (1,), matching the PyTorch buffer tensor([0.0])


def _do_nothing_loss_ref(scores, labels):
    """Pure-JAX reference matching the PyTorch forward."""
    assert scores.shape[1] > 1
    return jnp.zeros((1,), dtype=jnp.float32)


if __name__ == "__main__":
    key = jax.random.PRNGKey(0)
    k1, k2 = jax.random.split(key)

    n, c = 8, 16  # small batch of 8 samples, 16 classes (C > 1)
    scores = jax.random.normal(k1, (n, c), dtype=jnp.float32)
    labels = jax.random.randint(k2, (n,), 0, c, dtype=jnp.int32)

    criterion = DoNothingLoss()
    loss = criterion(scores, labels)
    jax.block_until_ready(loss)

    ref = _do_nothing_loss_ref(scores, labels)
    assert loss.shape == (1,), loss.shape
    assert loss.dtype == jnp.float32, loss.dtype
    assert jnp.allclose(loss, ref), (loss, ref)

    print("KERNEL_OK")
</pallas_src>

<mosaic_0001>
module attributes {stable_mosaic.version = 11 : i64} {
  func.func @_do_nothing_loss_kernel(%arg0: memref<1x1xf32, #tpu.memory_space<vmem>>, %arg1: memref<1x1xf32, #tpu.memory_space<vmem>>) attributes {dimension_semantics = [], scalar_prefetch = 0 : i64, scratch_operands = 0 : i64, tpu.core_type = #tpu.core_type<tc>} {
    %c0 = arith.constant 0 : index
    %c0_0 = arith.constant 0 : index
    %0 = vector.load %arg0[%c0, %c0_0] : memref<1x1xf32, #tpu.memory_space<vmem>>, vector<1x1xf32>
    %c0_1 = arith.constant 0 : index
    %c0_2 = arith.constant 0 : index
    %1 = vector.load %arg1[%c0_1, %c0_2] : memref<1x1xf32, #tpu.memory_space<vmem>>, vector<1x1xf32>
    tpu.vector_store %arg1[%c0_1, %c0_2], %0 {strides = array<i32>} : memref<1x1xf32, #tpu.memory_space<vmem>>, vector<1x1xf32>,
    return
  }
}

</mosaic_0001>

<llo_original>
// kernel: tpu_custom_call.1
$region0: #{tpu_custom_call.1}
  #allocation0 [shape = 'u32[]', space=smem, size = 0x4, offset = 0x4, fixed_abs, tag = 'smem constant byte address 0x4 - core index']
  #allocation1 [shape = 'u32[144,128]{1,0:T(1,128)}', space=vmem, size = 0x12000, scoped, tag = 'internal scratch']
  #allocation2 [shape = 'f32[1,1]{1,0:T(1,128)S(1)}', space=vmem, size = 0x200, scoped, tag = 'scoped memory for tpu_custom_call.1']
  %s0 = inlined_call_operand.<no memory space> [shape: f32[1,1], index: 0, kind: input, shape index: {}]
  %s1 = inlined_call_operand.hbm [shape: f32[1,1], index: 1, kind: output, shape index: {}]
  %s2 = sld [smem:[#allocation0]]
  $region14: #{tpu_custom_call.1} parent=0
    _
  %s4 = ssub.s32 1, %s2
  %s5 = scalar_select 0, %s4, %s2
  %v6 = vstv %s0
  %7 = vst [vmem:[#allocation2] sm:$0x1] %v6
  $region1: #{tpu_custom_call.1} parent=0
    #allocation3 [shape = 'u8[512]{0}', space=vmem, size = 0x400, scoped, tag = 'output window, operand 0, single buffered']
    #allocation4 [shape = 's32[1]{0}', space=sflag, size = 0x4, scoped, tag = 'scoped memory for tpu_custom_call.1']
    %8 = vsyncpa [#allocation4], 0
    // Predicated region
    $region2: #{tpu_custom_call.1} parent=1 // pred_check
      _
    $region3: #{tpu_custom_call.1} parent=1 // pred_check_branch
      %10 = sbr.rel (0) target = $region5
    $region4: #{tpu_custom_call.1} parent=1 // pred_region
      _
    $region5: #{tpu_custom_call.1} parent=1 // pred_fallthru
      _
    %v11 = vld [vmem:[#allocation2] sm:$0x1]
    %vm12 = vcmask 0
    %13 = vst.msk [vmem:[#allocation3] sm:$0x1] %vm12, %v11
    // Predicated region
    $region6: #{tpu_custom_call.1} parent=1 // pred_check
      _
    $region7: #{tpu_custom_call.1} parent=1 // pred_check_branch
      %15 = sbr.rel (0) target = $region9
    $region8: #{tpu_custom_call.1} parent=1 // pred_region
      %s17 = ssub.s32 16, 16
      %18 = vsyncadd [#allocation4], %s17
      %s20 = sshll.u32 [#allocation3], 4
      %s21 = int_to_ptr.vmem [resolvable:$true] %s20
      %23 = dma.vmem_to_hbm [thread:$0]  %s21, 16, %s1, [#allocation4]
    $region9: #{tpu_custom_call.1} parent=1 // pred_fallthru
      _
    // Predicated region
    $region10: #{tpu_custom_call.1} parent=1 // pred_check
      _
    $region11: #{tpu_custom_call.1} parent=1 // pred_check_branch
      %25 = sbr.rel (0) target = $region13
    $region12: #{tpu_custom_call.1} parent=1 // pred_region
      %26 = dma.done [#allocation4], 16
    $region13: #{tpu_custom_call.1} parent=1 // pred_fallthru
      _
    %27 = vsyncpa [#allocation4], 1

</llo_original>
